<compile_context>
chip_gen: v7x
topology: tpu7x:2x2x1
jax: 0.10.0
libtpu: 0.0.40
codegen_flags: <defaults>
</compile_context>

<pallas_src>
import functools

import jax
import jax.numpy as jnp
import numpy as np
from jax.experimental import pallas as pl
from jax.experimental.pallas import tpu as pltpu

FCS1_UNITS = 256
FC2_UNITS = 128


def critic_kernel(sa_ref, w_in_ref, b_in_ref, w2s_ref, w3_ref, b3_ref,
                  out_ref, *, H1):
    # One block-diagonal MXU matmul computes the fcs1 pre-activation AND the
    # action side of fc2 in a single push (feature-major, batch on lanes):
    #   m = [[W1^T, 0], [0, W2a^T]] @ [s^T ; a^T]   -> (H1+H2, TB) f32
    m = jnp.dot(w_in_ref[...], sa_ref[...], preferred_element_type=jnp.float32)
    m = m + b_in_ref[...]                      # [b1;b2] column, lane-broadcast

    xs_t = jnp.maximum(m[:H1, :], 0.0)         # relu(fcs1(state))   (H1, TB)
    a_b2 = m[H1:, :]                           # action @ W2a + b2   (H2, TB)

    # fc2: state half on the MXU (bf16 operands, f32 acc), action half reused.
    h_t = jnp.dot(w2s_ref[...], xs_t.astype(w2s_ref.dtype),
                  preferred_element_type=jnp.float32) + a_b2
    h_t = jnp.maximum(h_t, 0.0)                # relu(fc2)           (H2, TB)

    # fc3: w3-weighted sublane reduction -> lane-dense (1, TB) row.
    # No f32 transpose, no N=1 MXU matmul, full-lane (unmasked) store.
    q = jnp.sum(h_t * w3_ref[...], axis=0, keepdims=True) + b3_ref[0]
    out_ref[...] = q.astype(out_ref.dtype)


def prepare_params(params, *, use_bf16=True):
    """One-time conversion to kernel layout (keep OUT of the hot path):
    block-diagonal input weight, transposed fc2 weight, fused bias column,
    bf16 casts, padded contraction dim."""
    w1, b1, w2s, w2a, b2, w3, b3 = params
    S, H1 = w1.shape
    A, H2 = w2a.shape
    K = S + A
    K_pad = ((K + 15) // 16) * 16          # clean bf16 sublane layout; zeros are exact
    dot_dtype = jnp.bfloat16 if use_bf16 else jnp.float32

    w_in = jnp.zeros((H1 + H2, K_pad), jnp.float32)
    w_in = w_in.at[:H1, :S].set(w1.T)          # fcs1
    w_in = w_in.at[H1:, S:K].set(w2a.T)        # action half of fc2
    w_in = w_in.astype(dot_dtype)

    b_in = jnp.concatenate(
        [b1.reshape(H1), b2.reshape(H2)]).reshape(H1 + H2, 1).astype(jnp.float32)
    w2s_t = w2s.T.astype(dot_dtype)            # (H2, H1)
    w3_col = w3.reshape(H2, 1).astype(jnp.float32)   # matches feature-major reduce
    b3_s = b3.reshape(1).astype(jnp.float32)

    return dict(w_in=w_in, b_in=b_in, w2s_t=w2s_t, w3_col=w3_col, b3=b3_s,
                dims=(S, A, H1, H2, K_pad), dot_dtype=dot_dtype)


def critic_forward(state, action, prepared, *, tile_b=512):
    """Fused Critic forward. Returns Q of shape (B, 1), float32."""
    S, A, H1, H2, K_pad = prepared["dims"]
    dot_dtype = prepared["dot_dtype"]
    B = state.shape[0]
    assert action.shape == (B, A) and state.shape == (B, S)

    # --- tile / grid selection -------------------------------------------
    Bp128 = pl.cdiv(B, 128) * 128          # lane-aligned batch
    tb = min(tile_b, Bp128)                # single grid step if batch fits one tile
    grid_b = pl.cdiv(Bp128, tb)
    if grid_b > 1 and grid_b % 2 == 1:
        # v7x megacore: prefer an even number of batch tiles so the "parallel"
        # axis gives work to both TensorCores (may slightly over-pad B).
        grid_b += 1
        tb = pl.cdiv(pl.cdiv(Bp128, grid_b), 128) * 128
        grid_b = pl.cdiv(Bp128, tb)
    Bp = grid_b * tb

    # Feature-major activations: (S+A, Bp) with batch on the lane axis.
    # (one tiny fused XLA concat+transpose+cast+pad; padded rows/lanes are zero)
    sa_t = jnp.concatenate([state, action], axis=1).T.astype(dot_dtype)
    sa_t = jnp.pad(sa_t, ((0, K_pad - (S + A)), (0, Bp - B)))

    kernel = functools.partial(critic_kernel, H1=H1)

    in_specs = [
        pl.BlockSpec((K_pad, tb), lambda i: (0, i)),        # activations (streamed)
        pl.BlockSpec((H1 + H2, K_pad), lambda i: (0, 0)),   # block-diag W (pinned)
        pl.BlockSpec((H1 + H2, 1), lambda i: (0, 0)),       # [b1;b2] col  (pinned)
        pl.BlockSpec((H2, H1), lambda i: (0, 0)),           # W2s^T        (pinned)
        pl.BlockSpec((H2, 1), lambda i: (0, 0)),            # w3 column    (pinned)
        pl.BlockSpec(memory_space=pltpu.MemorySpace.SMEM),  # b3 scalar
    ]
    # Lane-dense output: one (1, TB) row per batch tile of a (1, Bp) slab.
    out_specs = pl.BlockSpec((1, tb), lambda i: (0, i))

    flops = int(2 * B * (S * H1 + (H1 + A) * H2 + H2))
    bytes_accessed = int(sa_t.nbytes + prepared["w_in"].nbytes
                         + prepared["b_in"].nbytes + prepared["w2s_t"].nbytes
                         + prepared["w3_col"].nbytes + Bp * 4)

    out = pl.pallas_call(
        kernel,
        out_shape=jax.ShapeDtypeStruct((1, Bp), jnp.float32),
        grid_spec=pltpu.PrefetchScalarGridSpec(
            num_scalar_prefetch=0,
            grid=(grid_b,),
            in_specs=in_specs,
            out_specs=out_specs,
        ),
        compiler_params=pltpu.CompilerParams(
            dimension_semantics=("parallel",)),
        cost_estimate=pl.CostEstimate(
            flops=flops, transcendentals=0, bytes_accessed=bytes_accessed),
    )(sa_t, prepared["w_in"], prepared["b_in"], prepared["w2s_t"],
      prepared["w3_col"], prepared["b3"])

    return out[0, :B].reshape(B, 1)


def init_params(key, state_size, action_size,
                fcs1_units=FCS1_UNITS, fc2_units=FC2_UNITS):
    """Deterministic init mirroring Critic.reset_parameters().
    hidden_init uses weight.size()[0] == out_features (as in the reference);
    biases keep PyTorch's default uniform(+-1/sqrt(in_features))."""
    ks = jax.random.split(key, 6)

    lim1 = 1.0 / np.sqrt(fcs1_units)
    w1 = jax.random.uniform(ks[0], (state_size, fcs1_units),
                            jnp.float32, -lim1, lim1)
    b1 = jax.random.uniform(ks[1], (1, fcs1_units), jnp.float32,
                            -1.0 / np.sqrt(state_size), 1.0 / np.sqrt(state_size))

    lim2 = 1.0 / np.sqrt(fc2_units)
    fc2_in = fcs1_units + action_size
    w2 = jax.random.uniform(ks[2], (fc2_in, fc2_units),
                            jnp.float32, -lim2, lim2)
    w2s, w2a = w2[:fcs1_units], w2[fcs1_units:]
    b2 = jax.random.uniform(ks[3], (1, fc2_units), jnp.float32,
                            -1.0 / np.sqrt(fc2_in), 1.0 / np.sqrt(fc2_in))

    w3 = jax.random.uniform(ks[4], (fc2_units, 1), jnp.float32, -3e-3, 3e-3)
    b3 = jax.random.uniform(ks[5], (1,), jnp.float32,
                            -1.0 / np.sqrt(fc2_units), 1.0 / np.sqrt(fc2_units))

    return (w1, b1, w2s, w2a, b2, w3, b3)


def critic_ref(state, action, params, *, use_bf16=True):
    """Pure-JAX reference matching the kernel's numerics."""
    w1, b1, w2s, w2a, b2, w3, b3 = params
    dot_dtype = jnp.bfloat16 if use_bf16 else jnp.float32
    s = state.astype(dot_dtype)
    a = action.astype(dot_dtype)
    w1c, w2sc, w2ac = (w.astype(dot_dtype) for w in (w1, w2s, w2a))
    xs = jnp.maximum(
        jnp.dot(s, w1c, preferred_element_type=jnp.float32) + b1, 0.0)
    h = jnp.maximum(
        jnp.dot(xs.astype(dot_dtype), w2sc, preferred_element_type=jnp.float32)
        + jnp.dot(a, w2ac, preferred_element_type=jnp.float32) + b2, 0.0)
    return jnp.dot(h, w3, preferred_element_type=jnp.float32) + b3


if __name__ == "__main__":
    B, STATE_SIZE, ACTION_SIZE = 200, 33, 4   # non-multiple of 128 -> exercises padding

    key = jax.random.PRNGKey(0)
    k_state, k_action, k_params = jax.random.split(key, 3)

    state = jax.random.normal(k_state, (B, STATE_SIZE), jnp.float32)
    action = jax.random.normal(k_action, (B, ACTION_SIZE), jnp.float32)
    params = init_params(k_params, STATE_SIZE, ACTION_SIZE)
    prepared = prepare_params(params, use_bf16=True)

    # Single-tile path (whole batch in one 256-wide tile, grid=1).
    q = critic_forward(state, action, prepared, tile_b=512)
    q = jax.block_until_ready(q)
    assert q.shape == (B, 1)

    # Multi-tile streamed path (grid=2) to exercise the pipelined case.
    q_tiled = critic_forward(state, action, prepared, tile_b=128)
    q_tiled = jax.block_until_ready(q_tiled)

    # Tight check against a reference using matching precision (bf16 matmul
    # operands, f32 accumulation / elementwise).
    q_ref = critic_ref(state, action, params, use_bf16=True)
    np.testing.assert_allclose(np.asarray(q), np.asarray(q_ref),
                               rtol=2e-4, atol=2e-4)
    np.testing.assert_allclose(np.asarray(q_tiled), np.asarray(q_ref),
                               rtol=2e-4, atol=2e-4)

    # Loose sanity check against full-f32 math (bf16 operand rounding only).
    q_f32 = critic_ref(state, action, params, use_bf16=False)
    max_err = float(jnp.max(jnp.abs(q - q_f32)))
    assert max_err < 1e-2, f"bf16 drift too large: {max_err}"

    print("KERNEL_OK")
</pallas_src>

<mosaic_0001>
module attributes {stable_mosaic.version = 11 : i64} {
  func.func @critic_kernel(%arg0: i32, %arg1: memref<48x256xbf16, #tpu.memory_space<vmem>>, %arg2: memref<384x48xbf16, #tpu.memory_space<vmem>>, %arg3: memref<384x1xf32, #tpu.memory_space<vmem>>, %arg4: memref<128x256xbf16, #tpu.memory_space<vmem>>, %arg5: memref<128x1xf32, #tpu.memory_space<vmem>>, %arg6: memref<1xf32, #tpu.memory_space<smem>>, %arg7: memref<1x256xf32, #tpu.memory_space<vmem>>) attributes {dimension_semantics = [#tpu.dimension_semantics<parallel>], iteration_bounds = array<i64: 1>, scalar_prefetch = 0 : i64, scratch_operands = 0 : i64, tpu.core_type = #tpu.core_type<tc>, window_params = [{transform_indices = @transform_0, window_bounds = array<i64: 48, 256>}, {pipeline_mode = #tpu.pipeline_mode<synchronous>, transform_indices = @transform_1, window_bounds = array<i64: 384, 48>}, {pipeline_mode = #tpu.pipeline_mode<synchronous>, transform_indices = @transform_2, window_bounds = array<i64: 384, 1>}, {pipeline_mode = #tpu.pipeline_mode<synchronous>, transform_indices = @transform_3, window_bounds = array<i64: 128, 256>}, {pipeline_mode = #tpu.pipeline_mode<synchronous>, transform_indices = @transform_4, window_bounds = array<i64: 128, 1>}, {transform_indices = @transform_5, window_bounds = array<i64: 1>}, {transform_indices = @transform_6, window_bounds = array<i64: 1, 256>}]} {
    %c0 = arith.constant 0 : index
    %c0_0 = arith.constant 0 : index
    %0 = vector.load %arg2[%c0, %c0_0] : memref<384x48xbf16, #tpu.memory_space<vmem>>, vector<384x48xbf16>
    %c0_1 = arith.constant 0 : index
    %c0_2 = arith.constant 0 : index
    %1 = vector.load %arg1[%c0_1, %c0_2] : memref<48x256xbf16, #tpu.memory_space<vmem>>, vector<48x256xbf16>
    %cst = arith.constant dense<0.000000e+00> : vector<384x256xf32>
    %2 = tpu.matmul %0, %1, %cst {dimension_numbers = #tpu.dot_dimension_numbers<[1], [0], [0], [1], [0, 0, 1, 1], [], []>} : vector<384x48xbf16>, vector<48x256xbf16>, vector<384x256xf32> -> vector<384x256xf32>
    %c0_3 = arith.constant 0 : index
    %c0_4 = arith.constant 0 : index
    %3 = vector.load %arg3[%c0_3, %c0_4] : memref<384x1xf32, #tpu.memory_space<vmem>>, vector<384x1xf32>
    %4 = vector.broadcast %3 : vector<384x1xf32> to vector<384x256xf32>
    %5 = arith.addf %2, %4 : vector<384x256xf32>
    %6 = vector.extract_strided_slice %5 {offsets = [0, 0], sizes = [256, 256], strides = [1, 1]} : vector<384x256xf32> to vector<256x256xf32>
    %cst_5 = arith.constant 0.000000e+00 : f32
    %7 = vector.broadcast %cst_5 : f32 to vector<256x256xf32>
    %8 = arith.maximumf %6, %7 : vector<256x256xf32>
    %9 = vector.extract_strided_slice %5 {offsets = [256, 0], sizes = [128, 256], strides = [1, 1]} : vector<384x256xf32> to vector<128x256xf32>
    %c0_6 = arith.constant 0 : index
    %c0_7 = arith.constant 0 : index
    %10 = vector.load %arg4[%c0_6, %c0_7] : memref<128x256xbf16, #tpu.memory_space<vmem>>, vector<128x256xbf16>
    %11 = arith.truncf %8 : vector<256x256xf32> to vector<256x256xbf16>
    %cst_8 = arith.constant dense<0.000000e+00> : vector<128x256xf32>
    %12 = tpu.matmul %10, %11, %cst_8 {dimension_numbers = #tpu.dot_dimension_numbers<[1], [0], [0], [1], [0, 0, 1, 1], [], []>} : vector<128x256xbf16>, vector<256x256xbf16>, vector<128x256xf32> -> vector<128x256xf32>
    %13 = arith.addf %12, %9 : vector<128x256xf32>
    %cst_9 = arith.constant 0.000000e+00 : f32
    %14 = vector.broadcast %cst_9 : f32 to vector<128x256xf32>
    %15 = arith.maximumf %13, %14 : vector<128x256xf32>
    %c0_10 = arith.constant 0 : index
    %c0_11 = arith.constant 0 : index
    %16 = vector.load %arg5[%c0_10, %c0_11] : memref<128x1xf32, #tpu.memory_space<vmem>>, vector<128x1xf32>
    %17 = vector.broadcast %16 : vector<128x1xf32> to vector<128x256xf32>
    %18 = arith.mulf %15, %17 : vector<128x256xf32>
    %cst_12 = arith.constant dense<0.000000e+00> : vector<256xf32>
    %19 = vector.multi_reduction <add>, %18, %cst_12 [0] : vector<128x256xf32> to vector<256xf32>
    %20 = vector.shape_cast %19 : vector<256xf32> to vector<1x256xf32>
    %c0_13 = arith.constant 0 : index
    %21 = memref.load %arg6[%c0_13] : memref<1xf32, #tpu.memory_space<smem>>
    %22 = vector.broadcast %21 : f32 to vector<1x256xf32>
    %23 = arith.addf %20, %22 : vector<1x256xf32>
    %c0_14 = arith.constant 0 : index
    %c0_15 = arith.constant 0 : index
    %24 = vector.load %arg7[%c0_14, %c0_15] : memref<1x256xf32, #tpu.memory_space<vmem>>, vector<1x256xf32>
    tpu.vector_store %arg7[%c0_14, %c0_15], %23 {strides = array<i32>} : memref<1x256xf32, #tpu.memory_space<vmem>>, vector<1x256xf32>,
    return
  }
  func.func @transform_0(%arg0: i32) -> (i32, i32) {
    %c0_i32 = arith.constant 0 : i32
    %c0_i32_0 = arith.constant 0 : i32
    return %c0_i32, %arg0 : i32, i32
  }
  func.func @transform_1(%arg0: i32) -> (i32, i32) {
    %c0_i32 = arith.constant 0 : i32
    %c0_i32_0 = arith.constant 0 : i32
    %c0_i32_1 = arith.constant 0 : i32
    return %c0_i32, %c0_i32_0 : i32, i32
  }
  func.func @transform_2(%arg0: i32) -> (i32, i32) {
    %c0_i32 = arith.constant 0 : i32
    %c0_i32_0 = arith.constant 0 : i32
    %c0_i32_1 = arith.constant 0 : i32
    return %c0_i32, %c0_i32_0 : i32, i32
  }
  func.func @transform_3(%arg0: i32) -> (i32, i32) {
    %c0_i32 = arith.constant 0 : i32
    %c0_i32_0 = arith.constant 0 : i32
    %c0_i32_1 = arith.constant 0 : i32
    return %c0_i32, %c0_i32_0 : i32, i32
  }
  func.func @transform_4(%arg0: i32) -> (i32, i32) {
    %c0_i32 = arith.constant 0 : i32
    %c0_i32_0 = arith.constant 0 : i32
    %c0_i32_1 = arith.constant 0 : i32
    return %c0_i32, %c0_i32_0 : i32, i32
  }
  func.func @transform_5(%arg0: i32) -> i32 {
    %c0_i32 = arith.constant 0 : i32
    %c0_i32_0 = arith.constant 0 : i32
    return %c0_i32 : i32
  }
  func.func @transform_6(%arg0: i32) -> (i32, i32) {
    %c0_i32 = arith.constant 0 : i32
    %c0_i32_0 = arith.constant 0 : i32
    return %c0_i32, %arg0 : i32, i32
  }
}

</mosaic_0001>

<llo_original>
// kernel: tpu_custom_call.1
$region0: #{tpu_custom_call.1}
  #allocation0 [shape = 'u32[]', space=smem, size = 0x4, offset = 0x4, fixed_abs, tag = 'smem constant byte address 0x4 - core index']
  #allocation1 [shape = 'u32[144,128]{1,0:T(1,128)}', space=vmem, size = 0x12000, scoped, tag = 'internal scratch']
  #allocation2 [shape = 'f32[1]{0:T(128)S(6)}', space=smem, size = 0x200, scoped, tag = 'scoped memory for tpu_custom_call.1']
  %s0 = inlined_call_operand.vmem [shape: bf16[48,256], index: 0, kind: input, shape index: {}]
  %s1 = inlined_call_operand.vmem [shape: bf16[384,48], index: 1, kind: input, shape index: {}]
  %s2 = inlined_call_operand.vmem [shape: f32[384,1], index: 2, kind: input, shape index: {}]
  %s3 = inlined_call_operand.vmem [shape: bf16[128,256], index: 3, kind: input, shape index: {}]
  %s4 = inlined_call_operand.vmem [shape: f32[128,1], index: 4, kind: input, shape index: {}]
  %s5 = inlined_call_operand.<no memory space> [shape: f32[1], index: 5, kind: input, shape index: {}]
  %s6 = inlined_call_operand.hbm [shape: f32[1,256], index: 6, kind: output, shape index: {}]
  %s7 = sld [smem:[#allocation0]]
  $region34: #{tpu_custom_call.1} parent=0
    _
  %s9 = ssub.s32 1, %s7
  %s10 = scalar_select 0, %s9, %s7
  %11 = sst [smem:[#allocation2]] %s5
  $region1: #{tpu_custom_call.1} parent=0
    #allocation3 [shape = 'u8[1024]{0}', space=vmem, size = 0x400, scoped, tag = 'output window, operand 0, single buffered']
    #allocation4 [shape = 's32[1]{0}', space=sflag, size = 0x4, scoped, tag = 'scoped memory for tpu_custom_call.1']
    %12 = vsyncpa [#allocation4], 0
    // Predicated region
    $region2: #{tpu_custom_call.1} parent=1 // pred_check
      _
    $region3: #{tpu_custom_call.1} parent=1 // pred_check_branch
      %14 = sbr.rel (0) target = $region5
    $region4: #{tpu_custom_call.1} parent=1 // pred_region
      _
    $region5: #{tpu_custom_call.1} parent=1 // pred_fallthru
      _
    // Predicated region
    $region6: #{tpu_custom_call.1} parent=1 // pred_check
      _
    $region7: #{tpu_custom_call.1} parent=1 // pred_check_branch
      %16 = sbr.rel (0) target = $region9
    $region8: #{tpu_custom_call.1} parent=1 // pred_region
      _
    $region9: #{tpu_custom_call.1} parent=1 // pred_fallthru
      _
    // Predicated region
    $region10: #{tpu_custom_call.1} parent=1 // pred_check
      _
    $region11: #{tpu_custom_call.1} parent=1 // pred_check_branch
      %18 = sbr.rel (0) target = $region13
    $region12: #{tpu_custom_call.1} parent=1 // pred_region
      _
    $region13: #{tpu_custom_call.1} parent=1 // pred_fallthru
      _
    // Predicated region
    $region14: #{tpu_custom_call.1} parent=1 // pred_check
      _
    $region15: #{tpu_custom_call.1} parent=1 // pred_check_branch
      %20 = sbr.rel (0) target = $region17
    $region16: #{tpu_custom_call.1} parent=1 // pred_region
      _
    $region17: #{tpu_custom_call.1} parent=1 // pred_fallthru
      _
    // Predicated region
    $region18: #{tpu_custom_call.1} parent=1 // pred_check
      _
    $region19: #{tpu_custom_call.1} parent=1 // pred_check_branch
      %22 = sbr.rel (0) target = $region21
    $region20: #{tpu_custom_call.1} parent=1 // pred_region
      _
    $region21: #{tpu_custom_call.1} parent=1 // pred_fallthru
      _
    // Predicated region
    $region22: #{tpu_custom_call.1} parent=1 // pred_check
      _
    $region23: #{tpu_custom_call.1} parent=1 // pred_check_branch
      %24 = sbr.rel (0) target = $region25
    $region24: #{tpu_custom_call.1} parent=1 // pred_region
      _
    $region25: #{tpu_custom_call.1} parent=1 // pred_fallthru
      _
    %v26 = vld [vmem:[%s1] sm:$0xf]
    %v27 = vld [vmem:[%s1 + $0x4] sm:$0xf]
    %v28 = vld [vmem:[%s1 + $0x8] sm:$0xf]
    %v29 = vld [vmem:[%s1 + $0xc] sm:$0xf]
    %v30 = vld [vmem:[%s1 + $0x10] sm:$0xf]
    %v31 = vld [vmem:[%s1 + $0x14] sm:$0xf]
    %v32 = vld [vmem:[%s1 + $0x18] sm:$0xf]
    %v33 = vld [vmem:[%s1 + $0x1c] sm:$0xf]
    %v34 = vld [vmem:[%s1 + $0x20] sm:$0xf]
    %v35 = vld [vmem:[%s1 + $0x24] sm:$0xf]
    %v36 = vld [vmem:[%s1 + $0x28] sm:$0xf]
    %v37 = vld [vmem:[%s1 + $0x2c] sm:$0xf]
    %v38 = vld [vmem:[%s1 + $0x30] sm:$0xf]
    %v39 = vld [vmem:[%s1 + $0x34] sm:$0xf]
    %v40 = vld [vmem:[%s1 + $0x38] sm:$0xf]
    %v41 = vld [vmem:[%s1 + $0x3c] sm:$0xf]
    %v42 = vld [vmem:[%s1 + $0x40] sm:$0xf]
    %v43 = vld [vmem:[%s1 + $0x44] sm:$0xf]
    %v44 = vld [vmem:[%s1 + $0x48] sm:$0xf]
    %v45 = vld [vmem:[%s1 + $0x4c] sm:$0xf]
    %v46 = vld [vmem:[%s1 + $0x50] sm:$0xf]
    %v47 = vld [vmem:[%s1 + $0x54] sm:$0xf]
    %v48 = vld [vmem:[%s1 + $0x58] sm:$0xf]
    %v49 = vld [vmem:[%s1 + $0x5c] sm:$0xf]
    %v50 = vld [vmem:[%s1 + $0x60] sm:$0xf]
    %v51 = vld [vmem:[%s1 + $0x64] sm:$0xf]
    %v52 = vld [vmem:[%s1 + $0x68] sm:$0xf]
    %v53 = vld [vmem:[%s1 + $0x6c] sm:$0xf]
    %v54 = vld [vmem:[%s1 + $0x70] sm:$0xf]
    %v55 = vld [vmem:[%s1 + $0x74] sm:$0xf]
    %v56 = vld [vmem:[%s1 + $0x78] sm:$0xf]
    %v57 = vld [vmem:[%s1 + $0x7c] sm:$0xf]
    %v58 = vld [vmem:[%s1 + $0x80] sm:$0xf]
    %v59 = vld [vmem:[%s1 + $0x84] sm:$0xf]
    %v60 = vld [vmem:[%s1 + $0x88] sm:$0xf]
    %v61 = vld [vmem:[%s1 + $0x8c] sm:$0xf]
    %v62 = vld [vmem:[%s1 + $0x90] sm:$0xf]
    %v63 = vld [vmem:[%s1 + $0x94] sm:$0xf]
    %v64 = vld [vmem:[%s1 + $0x98] sm:$0xf]
    %v65 = vld [vmem:[%s1 + $0x9c] sm:$0xf]
    %v66 = vld [vmem:[%s1 + $0xa0] sm:$0xf]
    %v67 = vld [vmem:[%s1 + $0xa4] sm:$0xf]
    %v68 = vld [vmem:[%s1 + $0xa8] sm:$0xf]
    %v69 = vld [vmem:[%s1 + $0xac] sm:$0xf]
    %v70 = vld [vmem:[%s1 + $0xb0] sm:$0xf]
    %v71 = vld [vmem:[%s1 + $0xb4] sm:$0xf]
    %v72 = vld [vmem:[%s1 + $0xb8] sm:$0xf]
    %v73 = vld [vmem:[%s1 + $0xbc] sm:$0xf]
    %v74 = vld [vmem:[%s0] sm:$0xff]
    %v75 = vld [vmem:[%s0 + $0x8] sm:$0xff]
    %v76 = vld [vmem:[%s0 + $0x10] sm:$0xff]
    %v77 = vld [vmem:[%s0 + $0x18] sm:$0xff]
    %v78 = vld [vmem:[%s0 + $0x20] sm:$0xff]
    %v79 = vld [vmem:[%s0 + $0x28] sm:$0xff]
    %v80 = vld [vmem:[%s2] sm:$0xff]
    %v81 = vld [vmem:[%s2 + $0x8] sm:$0xff]
    %v82 = vld [vmem:[%s2 + $0x10] sm:$0xff]
    %v83 = vld [vmem:[%s2 + $0x18] sm:$0xff]
    %v84 = vld [vmem:[%s2 + $0x20] sm:$0xff]
    %v85 = vld [vmem:[%s2 + $0x28] sm:$0xff]
    %v86 = vld [vmem:[%s2 + $0x30] sm:$0xff]
    %v87 = vld [vmem:[%s2 + $0x38] sm:$0xff]
    %v88 = vld [vmem:[%s2 + $0x40] sm:$0xff]
    %v89 = vld [vmem:[%s2 + $0x48] sm:$0xff]
    %v90 = vld [vmem:[%s2 + $0x50] sm:$0xff]
    %v91 = vld [vmem:[%s2 + $0x58] sm:$0xff]
    %v92 = vld [vmem:[%s2 + $0x60] sm:$0xff]
    %v93 = vld [vmem:[%s2 + $0x68] sm:$0xff]
    %v94 = vld [vmem:[%s2 + $0x70] sm:$0xff]
    %v95 = vld [vmem:[%s2 + $0x78] sm:$0xff]
    %v96 = vld [vmem:[%s2 + $0x80] sm:$0xff]
    %v97 = vld [vmem:[%s2 + $0x88] sm:$0xff]
    %v98 = vld [vmem:[%s2 + $0x90] sm:$0xff]
    %v99 = vld [vmem:[%s2 + $0x98] sm:$0xff]
    %v100 = vld [vmem:[%s2 + $0xa0] sm:$0xff]
    %v101 = vld [vmem:[%s2 + $0xa8] sm:$0xff]
    %v102 = vld [vmem:[%s2 + $0xb0] sm:$0xff]
    %v103 = vld [vmem:[%s2 + $0xb8] sm:$0xff]
    %v104 = vld [vmem:[%s2 + $0xc0] sm:$0xff]
    %v105 = vld [vmem:[%s2 + $0xc8] sm:$0xff]
    %v106 = vld [vmem:[%s2 + $0xd0] sm:$0xff]
    %v107 = vld [vmem:[%s2 + $0xd8] sm:$0xff]
    %v108 = vld [vmem:[%s2 + $0xe0] sm:$0xff]
    %v109 = vld [vmem:[%s2 + $0xe8] sm:$0xff]
    %v110 = vld [vmem:[%s2 + $0xf0] sm:$0xff]
    %v111 = vld [vmem:[%s2 + $0xf8] sm:$0xff]
    %v112 = vld [vmem:[%s2 + $0x100] sm:$0xff]
    %v113 = vld [vmem:[%s2 + $0x108] sm:$0xff]
    %v114 = vld [vmem:[%s2 + $0x110] sm:$0xff]
    %v115 = vld [vmem:[%s2 + $0x118] sm:$0xff]
    %v116 = vld [vmem:[%s2 + $0x120] sm:$0xff]
    %v117 = vld [vmem:[%s2 + $0x128] sm:$0xff]
    %v118 = vld [vmem:[%s2 + $0x130] sm:$0xff]
    %v119 = vld [vmem:[%s2 + $0x138] sm:$0xff]
    %v120 = vld [vmem:[%s2 + $0x140] sm:$0xff]
    %v121 = vld [vmem:[%s2 + $0x148] sm:$0xff]
    %v122 = vld [vmem:[%s2 + $0x150] sm:$0xff]
    %v123 = vld [vmem:[%s2 + $0x158] sm:$0xff]
    %v124 = vld [vmem:[%s2 + $0x160] sm:$0xff]
    %v125 = vld [vmem:[%s2 + $0x168] sm:$0xff]
    %v126 = vld [vmem:[%s2 + $0x170] sm:$0xff]
    %v127 = vld [vmem:[%s2 + $0x178] sm:$0xff]
    %129 = vset.pattern.permute.xlu0 0
    %130 = vperm.xlu0 %129, %v80
    %v131 = vpop.permute.xlu0 %130
    %134 = vset.pattern.permute.xlu0 0
    %135 = vperm.xlu0 %134, %v81
    %v136 = vpop.permute.xlu0 %135
    %139 = vset.pattern.permute.xlu0 0
    %140 = vperm.xlu0 %139, %v82
    %v141 = vpop.permute.xlu0 %140
    %144 = vset.pattern.permute.xlu0 0
    %145 = vperm.xlu0 %144, %v83
    %v146 = vpop.permute.xlu0 %145
    %149 = vset.pattern.permute.xlu0 0
    %150 = vperm.xlu0 %149, %v84
    %v151 = vpop.permute.xlu0 %150
    %154 = vset.pattern.permute.xlu0 0
    %155 = vperm.xlu0 %154, %v85
    %v156 = vpop.permute.xlu0 %155
    %159 = vset.pattern.permute.xlu0 0
    %160 = vperm.xlu0 %159, %v86
    %v161 = vpop.permute.xlu0 %160
    %164 = vset.pattern.permute.xlu0 0
    %165 = vperm.xlu0 %164, %v87
    %v166 = vpop.permute.xlu0 %165
    %169 = vset.pattern.permute.xlu0 0
    %170 = vperm.xlu0 %169, %v88
    %v171 = vpop.permute.xlu0 %170
    %174 = vset.pattern.permute.xlu0 0
    %175 = vperm.xlu0 %174, %v89
    %v176 = vpop.permute.xlu0 %175
    %179 = vset.pattern.permute.xlu0 0
    %180 = vperm.xlu0 %179, %v90
    %v181 = vpop.permute.xlu0 %180
    %184 = vset.pattern.permute.xlu0 0
    %185 = vperm.xlu0 %184, %v91
    %v186 = vpop.permute.xlu0 %185
    %189 = vset.pattern.permute.xlu0 0
    %190 = vperm.xlu0 %189, %v92
    %v191 = vpop.permute.xlu0 %190
    %194 = vset.pattern.permute.xlu0 0
    %195 = vperm.xlu0 %194, %v93
    %v196 = vpop.permute.xlu0 %195
    %199 = vset.pattern.permute.xlu0 0
    %200 = vperm.xlu0 %199, %v94
    %v201 = vpop.permute.xlu0 %200
    %204 = vset.pattern.permute.xlu0 0
    %205 = vperm.xlu0 %204, %v95
    %v206 = vpop.permute.xlu0 %205
    %209 = vset.pattern.permute.xlu0 0
    %210 = vperm.xlu0 %209, %v96
    %v211 = vpop.permute.xlu0 %210
    %214 = vset.pattern.permute.xlu0 0
    %215 = vperm.xlu0 %214, %v97
    %v216 = vpop.permute.xlu0 %215
    %219 = vset.pattern.permute.xlu0 0
    %220 = vperm.xlu0 %219, %v98
    %v221 = vpop.permute.xlu0 %220
    %224 = vset.pattern.permute.xlu0 0
    %225 = vperm.xlu0 %224, %v99
    %v226 = vpop.permute.xlu0 %225
    %229 = vset.pattern.permute.xlu0 0
    %230 = vperm.xlu0 %229, %v100
    %v231 = vpop.permute.xlu0 %230
    %234 = vset.pattern.permute.xlu0 0
    %235 = vperm.xlu0 %234, %v101
    %v236 = vpop.permute.xlu0 %235
    %239 = vset.pattern.permute.xlu0 0
    %240 = vperm.xlu0 %239, %v102
    %v241 = vpop.permute.xlu0 %240
    %244 = vset.pattern.permute.xlu0 0
    %245 = vperm.xlu0 %244, %v103
    %v246 = vpop.permute.xlu0 %245
    %249 = vset.pattern.permute.xlu0 0
    %250 = vperm.xlu0 %249, %v104
    %v251 = vpop.permute.xlu0 %250
    %254 = vset.pattern.permute.xlu0 0
    %255 = vperm.xlu0 %254, %v105
    %v256 = vpop.permute.xlu0 %255
    %259 = vset.pattern.permute.xlu0 0
    %260 = vperm.xlu0 %259, %v106
    %v261 = vpop.permute.xlu0 %260
    %264 = vset.pattern.permute.xlu0 0
    %265 = vperm.xlu0 %264, %v107
    %v266 = vpop.permute.xlu0 %265
    %269 = vset.pattern.permute.xlu0 0
    %270 = vperm.xlu0 %269, %v108
    %v271 = vpop.permute.xlu0 %270
    %274 = vset.pattern.permute.xlu0 0
    %275 = vperm.xlu0 %274, %v109
    %v276 = vpop.permute.xlu0 %275
    %279 = vset.pattern.permute.xlu0 0
    %280 = vperm.xlu0 %279, %v110
    %v281 = vpop.permute.xlu0 %280
    %284 = vset.pattern.permute.xlu0 0
    %285 = vperm.xlu0 %284, %v111
    %v286 = vpop.permute.xlu0 %285
    %289 = vset.pattern.permute.xlu0 0
    %290 = vperm.xlu0 %289, %v112
    %v291 = vpop.permute.xlu0 %290
    %294 = vset.pattern.permute.xlu0 0
    %295 = vperm.xlu0 %294, %v113
    %v296 = vpop.permute.xlu0 %295
    %299 = vset.pattern.permute.xlu0 0
    %300 = vperm.xlu0 %299, %v114
    %v301 = vpop.permute.xlu0 %300
    %304 = vset.pattern.permute.xlu0 0
    %305 = vperm.xlu0 %304, %v115
    %v306 = vpop.permute.xlu0 %305
    %309 = vset.pattern.permute.xlu0 0
    %310 = vperm.xlu0 %309, %v116
    %v311 = vpop.permute.xlu0 %310
    %314 = vset.pattern.permute.xlu0 0
    %315 = vperm.xlu0 %314, %v117
    %v316 = vpop.permute.xlu0 %315
    %319 = vset.pattern.permute.xlu0 0
    %320 = vperm.xlu0 %319, %v118
    %v321 = vpop.permute.xlu0 %320
    %324 = vset.pattern.permute.xlu0 0
    %325 = vperm.xlu0 %324, %v119
    %v326 = vpop.permute.xlu0 %325
    %329 = vset.pattern.permute.xlu0 0
    %330 = vperm.xlu0 %329, %v120
    %v331 = vpop.permute.xlu0 %330
    %334 = vset.pattern.permute.xlu0 0
    %335 = vperm.xlu0 %334, %v121
    %v336 = vpop.permute.xlu0 %335
    %339 = vset.pattern.permute.xlu0 0
    %340 = vperm.xlu0 %339, %v122
    %v341 = vpop.permute.xlu0 %340
    %344 = vset.pattern.permute.xlu0 0
    %345 = vperm.xlu0 %344, %v123
    %v346 = vpop.permute.xlu0 %345
    %349 = vset.pattern.permute.xlu0 0
    %350 = vperm.xlu0 %349, %v124
    %v351 = vpop.permute.xlu0 %350
    %354 = vset.pattern.permute.xlu0 0
    %355 = vperm.xlu0 %354, %v125
    %v356 = vpop.permute.xlu0 %355
    %359 = vset.pattern.permute.xlu0 0
    %360 = vperm.xlu0 %359, %v126
    %v361 = vpop.permute.xlu0 %360
    %364 = vset.pattern.permute.xlu0 0
    %365 = vperm.xlu0 %364, %v127
    %v366 = vpop.permute.xlu0 %365
    %v416 = vunpack.c.l.b16 %v26
    %v417 = vunpack.c.l.b16 %v27
    %v418 = vunpack.c.l.b16 %v28
    %v419 = vunpack.c.l.b16 %v29
    %v420 = vunpack.c.l.b16 %v30
    %v421 = vunpack.c.l.b16 %v31
    %v422 = vunpack.c.l.b16 %v32
    %v423 = vunpack.c.l.b16 %v33
    %v424 = vunpack.c.l.b16 %v34
    %v425 = vunpack.c.l.b16 %v35
    %v426 = vunpack.c.l.b16 %v36
    %v427 = vunpack.c.l.b16 %v37
    %v428 = vunpack.c.l.b16 %v38
    %v429 = vunpack.c.l.b16 %v39
    %v430 = vunpack.c.l.b16 %v40
    %v431 = vunpack.c.l.b16 %v41
    %v432 = vunpack.c.l.b16 %v42
    %v433 = vunpack.c.l.b16 %v43
    %v434 = vunpack.c.l.b16 %v44
    %v435 = vunpack.c.l.b16 %v45
    %v436 = vunpack.c.l.b16 %v46
    %v437 = vunpack.c.l.b16 %v47
    %v438 = vunpack.c.l.b16 %v48
    %v439 = vunpack.c.l.b16 %v49
    %v440 = vunpack.c.l.b16 %v50
    %v441 = vunpack.c.l.b16 %v51
    %v442 = vunpack.c.l.b16 %v52
    %v443 = vunpack.c.l.b16 %v53
    %v444 = vunpack.c.l.b16 %v54
    %v445 = vunpack.c.l.b16 %v55
    %v446 = vunpack.c.l.b16 %v56
    %v447 = vunpack.c.l.b16 %v57
    %v448 = vunpack.c.l.b16 %v58
    %v449 = vunpack.c.l.b16 %v59
    %v450 = vunpack.c.l.b16 %v60
    %v451 = vunpack.c.l.b16 %v61
    %v452 = vunpack.c.l.b16 %v62
    %v453 = vunpack.c.l.b16 %v63
    %v454 = vunpack.c.l.b16 %v64
    %v455 = vunpack.c.l.b16 %v65
    %v456 = vunpack.c.l.b16 %v66
    %v457 = vunpack.c.l.b16 %v67
    %v458 = vunpack.c.l.b16 %v68
    %v459 = vunpack.c.l.b16 %v69
    %v460 = vunpack.c.l.b16 %v70
    %v461 = vunpack.c.l.b16 %v71
    %v462 = vunpack.c.l.b16 %v72
    %v463 = vunpack.c.l.b16 %v73
    %v464 = vpack.c.b16 %v417, %v416
    %v465 = vpack.c.b16 %v419, %v418
    %v466 = vpack.c.b16 %v421, %v420
    %v467 = vpack.c.b16 %v423, %v422
    %v468 = vpack.c.b16 %v425, %v424
    %v469 = vpack.c.b16 %v427, %v426
    %v470 = vpack.c.b16 %v429, %v428
    %v471 = vpack.c.b16 %v431, %v430
    %v472 = vpack.c.b16 %v433, %v432
    %v473 = vpack.c.b16 %v435, %v434
    %v474 = vpack.c.b16 %v437, %v436
    %v475 = vpack.c.b16 %v439, %v438
    %v476 = vpack.c.b16 %v441, %v440
    %v477 = vpack.c.b16 %v443, %v442
    %v478 = vpack.c.b16 %v445, %v444
    %v479 = vpack.c.b16 %v447, %v446
    %v480 = vpack.c.b16 %v449, %v448
    %v481 = vpack.c.b16 %v451, %v450
    %v482 = vpack.c.b16 %v453, %v452
    %v483 = vpack.c.b16 %v455, %v454
    %v484 = vpack.c.b16 %v457, %v456
    %v485 = vpack.c.b16 %v459, %v458
    %v486 = vpack.c.b16 %v461, %v460
    %v487 = vpack.c.b16 %v463, %v462
    %v494 = vunpack.c.l.b16 %v74
    %v495 = vunpack.c.h.b16 %v74
    %v496 = vunpack.c.l.b16 %v75
    %v497 = vunpack.c.h.b16 %v75
    %v498 = vunpack.c.l.b16 %v76
    %v499 = vunpack.c.h.b16 %v76
    %v500 = vunpack.c.l.b16 %v77
    %v501 = vunpack.c.h.b16 %v77
    %v502 = vunpack.c.l.b16 %v78
    %v503 = vunpack.c.h.b16 %v78
    %v504 = vunpack.c.l.b16 %v79
    %v505 = vunpack.c.h.b16 %v79
    %v506 = vpack.c.b16 %v496, %v494
    %v507 = vpack.c.b16 %v497, %v495
    %v508 = vpack.c.b16 %v500, %v498
    %v509 = vpack.c.b16 %v501, %v499
    %v510 = vpack.c.b16 %v504, %v502
    %v511 = vpack.c.b16 %v505, %v503
    %vm518 = vcmask 392192
    %v520 = vsel %vm518, %v464, 0
    %v523 = vsel %vm518, %v465, 0
    %v526 = vsel %vm518, %v466, 0
    %v529 = vsel %vm518, %v467, 0
    %v532 = vsel %vm518, %v468, 0
    %v535 = vsel %vm518, %v469, 0
    %v538 = vsel %vm518, %v470, 0
    %v541 = vsel %vm518, %v471, 0
    %v544 = vsel %vm518, %v472, 0
    %v547 = vsel %vm518, %v473, 0
    %v550 = vsel %vm518, %v474, 0
    %v553 = vsel %vm518, %v475, 0
    %v556 = vsel %vm518, %v476, 0
    %v559 = vsel %vm518, %v477, 0
    %v562 = vsel %vm518, %v478, 0
    %v565 = vsel %vm518, %v479, 0
    %v568 = vsel %vm518, %v480, 0
    %v571 = vsel %vm518, %v481, 0
    %v574 = vsel %vm518, %v482, 0
    %v577 = vsel %vm518, %v483, 0
    %v580 = vsel %vm518, %v484, 0
    %v583 = vsel %vm518, %v485, 0
    %v586 = vsel %vm518, %v486, 0
    %v589 = vsel %vm518, %v487, 0
    %591 = vmatprep.subr.bf16.mxu0 %v507
    %592 = vmatpush1.bf16.msra.mxu0 %v506
    %593 = vmatprep.subr.bf16.mxu0 %v509
    %594 = vmatpush1.bf16.msra.mxu0 %v508
    %595 = vmatprep.subr.bf16.mxu0 %v511
    %596 = vmatpush1.bf16.msra.mxu0 %v510
    %597 = vmatprep.subr.bf16.mxu0 0
    %598 = vmatpush1.bf16.msra.mxu0 0
    %599 = vmatprep.subr.bf16.mxu0 0
    %600 = vmatpush1.bf16.msra.mxu0 0
    %601 = vmatprep.subr.bf16.mxu0 0
    %602 = vmatpush1.bf16.msra.mxu0 0
    %603 = vmatprep.subr.bf16.mxu0 0
    %604 = vmatpush1.bf16.msra.mxu0 0
    %605 = vmatprep.subr.bf16.mxu0 0
    %606 = vmatpush1.bf16.msra.mxu0 0
    %607 = vmatprep.subr.bf16.mxu0 0
    %608 = vmatpush1.bf16.msra.mxu0 0
    %609 = vmatprep.subr.bf16.mxu0 0
    %610 = vmatpush1.bf16.msra.mxu0 0
    %611 = vmatprep.subr.bf16.mxu0 0
    %612 = vmatpush1.bf16.msra.mxu0 0
    %613 = vmatprep.subr.bf16.mxu0 0
    %614 = vmatpush1.bf16.msra.mxu0 0
    %615 = vmatprep.subr.bf16.mxu0 0
    %616 = vmatpush1.bf16.msra.mxu0 0
    %617 = vmatprep.subr.bf16.mxu0 0
    %618 = vmatpush1.bf16.msra.mxu0 0
    %619 = vmatprep.subr.bf16.mxu0 0
    %620 = vmatpush1.bf16.msra.mxu0 0
    %621 = vmatprep.subr.bf16.mxu0 0
    %622 = vmatpush1.bf16.msra.mxu0 0
    %623 = vmatprep.mubr.bf16.mxu0 0
    %624 = vmatmul.mubr.bf16.gmra.mrb[0].mxu0 %v520
    %v625 = vpop.f32.mrb[0].mxu0
    %v626 = vadd.f32 %v131, %v625
    %v627 = vpop.f32.mrb[0].mxu0
    %v628 = vadd.f32 %v131, %v627
    %v629 = vpop.f32.mrb[0].mxu0
    %v630 = vadd.f32 %v136, %v629
    %v631 = vpop.f32.mrb[0].mxu0
    %v632 = vadd.f32 %v136, %v631
    %633 = vmatprep.mubr.bf16.mxu0 0
    %634 = vmatmul.mubr.bf16.gmra.mrb[0].mxu0 %v523
    %v635 = vpop.f32.mrb[0].mxu0
    %v636 = vadd.f32 %v141, %v635
    %v637 = vpop.f32.mrb[0].mxu0
    %v638 = vadd.f32 %v141, %v637
    %v639 = vpop.f32.mrb[0].mxu0
    %v640 = vadd.f32 %v146, %v639
    %v641 = vpop.f32.mrb[0].mxu0
    %v642 = vadd.f32 %v146, %v641
    %643 = vmatprep.mubr.bf16.mxu0 0
    %644 = vmatmul.mubr.bf16.gmra.mrb[0].mxu0 %v526
    %v645 = vpop.f32.mrb[0].mxu0
    %v646 = vadd.f32 %v151, %v645
    %v647 = vpop.f32.mrb[0].mxu0
    %v648 = vadd.f32 %v151, %v647
    %v649 = vpop.f32.mrb[0].mxu0
    %v650 = vadd.f32 %v156, %v649
    %v651 = vpop.f32.mrb[0].mxu0
    %v652 = vadd.f32 %v156, %v651
    %653 = vmatprep.mubr.bf16.mxu0 0
    %654 = vmatmul.mubr.bf16.gmra.mrb[0].mxu0 %v529
    %v655 = vpop.f32.mrb[0].mxu0
    %v656 = vadd.f32 %v161, %v655
    %v657 = vpop.f32.mrb[0].mxu0
    %v658 = vadd.f32 %v161, %v657
    %v659 = vpop.f32.mrb[0].mxu0
    %v660 = vadd.f32 %v166, %v659
    %v661 = vpop.f32.mrb[0].mxu0
    %v662 = vadd.f32 %v166, %v661
    %663 = vmatprep.mubr.bf16.mxu0 0
    %664 = vmatmul.mubr.bf16.gmra.mrb[0].mxu0 %v532
    %v665 = vpop.f32.mrb[0].mxu0
    %v666 = vadd.f32 %v171, %v665
    %v667 = vpop.f32.mrb[0].mxu0
    %v668 = vadd.f32 %v171, %v667
    %v669 = vpop.f32.mrb[0].mxu0
    %v670 = vadd.f32 %v176, %v669
    %v671 = vpop.f32.mrb[0].mxu0
    %v672 = vadd.f32 %v176, %v671
    %673 = vmatprep.mubr.bf16.mxu0 0
    %674 = vmatmul.mubr.bf16.gmra.mrb[0].mxu0 %v535
    %v675 = vpop.f32.mrb[0].mxu0
    %v676 = vadd.f32 %v181, %v675
    %v677 = vpop.f32.mrb[0].mxu0
    %v678 = vadd.f32 %v181, %v677
    %v679 = vpop.f32.mrb[0].mxu0
    %v680 = vadd.f32 %v186, %v679
    %v681 = vpop.f32.mrb[0].mxu0
    %v682 = vadd.f32 %v186, %v681
    %683 = vmatprep.mubr.bf16.mxu0 0
    %684 = vmatmul.mubr.bf16.gmra.mrb[0].mxu0 %v538
    %v685 = vpop.f32.mrb[0].mxu0
    %v686 = vadd.f32 %v191, %v685
    %v687 = vpop.f32.mrb[0].mxu0
    %v688 = vadd.f32 %v191, %v687
    %v689 = vpop.f32.mrb[0].mxu0
    %v690 = vadd.f32 %v196, %v689
    %v691 = vpop.f32.mrb[0].mxu0
    %v692 = vadd.f32 %v196, %v691
    %693 = vmatprep.mubr.bf16.mxu0 0
    %694 = vmatmul.mubr.bf16.gmra.mrb[0].mxu0 %v541
    %v695 = vpop.f32.mrb[0].mxu0
    %v696 = vadd.f32 %v201, %v695
    %v697 = vpop.f32.mrb[0].mxu0
    %v698 = vadd.f32 %v201, %v697
    %v699 = vpop.f32.mrb[0].mxu0
    %v700 = vadd.f32 %v206, %v699
    %v701 = vpop.f32.mrb[0].mxu0
    %v702 = vadd.f32 %v206, %v701
    %703 = vmatprep.mubr.bf16.mxu0 0
    %704 = vmatmul.mubr.bf16.gmra.mrb[0].mxu0 %v544
    %v705 = vpop.f32.mrb[0].mxu0
    %v706 = vadd.f32 %v211, %v705
    %v707 = vpop.f32.mrb[0].mxu0
    %v708 = vadd.f32 %v211, %v707
    %v709 = vpop.f32.mrb[0].mxu0
    %v710 = vadd.f32 %v216, %v709
    %v711 = vpop.f32.mrb[0].mxu0
    %v712 = vadd.f32 %v216, %v711
    %713 = vmatprep.mubr.bf16.mxu0 0
    %714 = vmatmul.mubr.bf16.gmra.mrb[0].mxu0 %v547
    %v715 = vpop.f32.mrb[0].mxu0
    %v716 = vadd.f32 %v221, %v715
    %v717 = vpop.f32.mrb[0].mxu0
    %v718 = vadd.f32 %v221, %v717
    %v719 = vpop.f32.mrb[0].mxu0
    %v720 = vadd.f32 %v226, %v719
    %v721 = vpop.f32.mrb[0].mxu0
    %v722 = vadd.f32 %v226, %v721
    %723 = vmatprep.mubr.bf16.mxu0 0
    %724 = vmatmul.mubr.bf16.gmra.mrb[0].mxu0 %v550
    %v725 = vpop.f32.mrb[0].mxu0
    %v726 = vadd.f32 %v231, %v725
    %v727 = vpop.f32.mrb[0].mxu0
    %v728 = vadd.f32 %v231, %v727
    %v729 = vpop.f32.mrb[0].mxu0
    %v730 = vadd.f32 %v236, %v729
    %v731 = vpop.f32.mrb[0].mxu0
    %v732 = vadd.f32 %v236, %v731
    %733 = vmatprep.mubr.bf16.mxu0 0
    %734 = vmatmul.mubr.bf16.gmra.mrb[0].mxu0 %v553
    %v735 = vpop.f32.mrb[0].mxu0
    %v736 = vadd.f32 %v241, %v735
    %v737 = vpop.f32.mrb[0].mxu0
    %v738 = vadd.f32 %v241, %v737
    %v739 = vpop.f32.mrb[0].mxu0
    %v740 = vadd.f32 %v246, %v739
    %v741 = vpop.f32.mrb[0].mxu0
    %v742 = vadd.f32 %v246, %v741
    %743 = vmatprep.mubr.bf16.mxu0 0
    %744 = vmatmul.mubr.bf16.gmra.mrb[0].mxu0 %v556
    %v745 = vpop.f32.mrb[0].mxu0
    %v746 = vadd.f32 %v251, %v745
    %v747 = vpop.f32.mrb[0].mxu0
    %v748 = vadd.f32 %v251, %v747
    %v749 = vpop.f32.mrb[0].mxu0
    %v750 = vadd.f32 %v256, %v749
    %v751 = vpop.f32.mrb[0].mxu0
    %v752 = vadd.f32 %v256, %v751
    %753 = vmatprep.mubr.bf16.mxu0 0
    %754 = vmatmul.mubr.bf16.gmra.mrb[0].mxu0 %v559
    %v755 = vpop.f32.mrb[0].mxu0
    %v756 = vadd.f32 %v261, %v755
    %v757 = vpop.f32.mrb[0].mxu0
    %v758 = vadd.f32 %v261, %v757
    %v759 = vpop.f32.mrb[0].mxu0
    %v760 = vadd.f32 %v266, %v759
    %v761 = vpop.f32.mrb[0].mxu0
    %v762 = vadd.f32 %v266, %v761
    %763 = vmatprep.mubr.bf16.mxu0 0
    %764 = vmatmul.mubr.bf16.gmra.mrb[0].mxu0 %v562
    %v765 = vpop.f32.mrb[0].mxu0
    %v766 = vadd.f32 %v271, %v765
    %v767 = vpop.f32.mrb[0].mxu0
    %v768 = vadd.f32 %v271, %v767
    %v769 = vpop.f32.mrb[0].mxu0
    %v770 = vadd.f32 %v276, %v769
    %v771 = vpop.f32.mrb[0].mxu0
    %v772 = vadd.f32 %v276, %v771
    %773 = vmatprep.mubr.bf16.mxu0 0
    %774 = vmatmul.mubr.bf16.gmra.mrb[0].mxu0 %v565
    %v775 = vpop.f32.mrb[0].mxu0
    %v776 = vadd.f32 %v281, %v775
    %v777 = vpop.f32.mrb[0].mxu0
    %v778 = vadd.f32 %v281, %v777
    %v779 = vpop.f32.mrb[0].mxu0
    %v780 = vadd.f32 %v286, %v779
    %v781 = vpop.f32.mrb[0].mxu0
    %v782 = vadd.f32 %v286, %v781
    %783 = vmatprep.mubr.bf16.mxu0 0
    %784 = vmatmul.mubr.bf16.gmra.mrb[0].mxu0 %v568
    %v785 = vpop.f32.mrb[0].mxu0
    %v786 = vadd.f32 %v291, %v785
    %v787 = vpop.f32.mrb[0].mxu0
    %v788 = vadd.f32 %v291, %v787
    %v789 = vpop.f32.mrb[0].mxu0
    %v790 = vadd.f32 %v296, %v789
    %v791 = vpop.f32.mrb[0].mxu0
    %v792 = vadd.f32 %v296, %v791
    %793 = vmatprep.mubr.bf16.mxu0 0
    %794 = vmatmul.mubr.bf16.gmra.mrb[0].mxu0 %v571
    %v795 = vpop.f32.mrb[0].mxu0
    %v796 = vadd.f32 %v301, %v795
    %v797 = vpop.f32.mrb[0].mxu0
    %v798 = vadd.f32 %v301, %v797
    %v799 = vpop.f32.mrb[0].mxu0
    %v800 = vadd.f32 %v306, %v799
    %v801 = vpop.f32.mrb[0].mxu0
    %v802 = vadd.f32 %v306, %v801
    %803 = vmatprep.mubr.bf16.mxu0 0
    %804 = vmatmul.mubr.bf16.gmra.mrb[0].mxu0 %v574
    %v805 = vpop.f32.mrb[0].mxu0
    %v806 = vadd.f32 %v311, %v805
    %v807 = vpop.f32.mrb[0].mxu0
    %v808 = vadd.f32 %v311, %v807
    %v809 = vpop.f32.mrb[0].mxu0
    %v810 = vadd.f32 %v316, %v809
    %v811 = vpop.f32.mrb[0].mxu0
    %v812 = vadd.f32 %v316, %v811
    %813 = vmatprep.mubr.bf16.mxu0 0
    %814 = vmatmul.mubr.bf16.gmra.mrb[0].mxu0 %v577
    %v815 = vpop.f32.mrb[0].mxu0
    %v816 = vadd.f32 %v321, %v815
    %v817 = vpop.f32.mrb[0].mxu0
    %v818 = vadd.f32 %v321, %v817
    %v819 = vpop.f32.mrb[0].mxu0
    %v820 = vadd.f32 %v326, %v819
    %v821 = vpop.f32.mrb[0].mxu0
    %v822 = vadd.f32 %v326, %v821
    %823 = vmatprep.mubr.bf16.mxu0 0
    %824 = vmatmul.mubr.bf16.gmra.mrb[0].mxu0 %v580
    %v825 = vpop.f32.mrb[0].mxu0
    %v826 = vadd.f32 %v331, %v825
    %v827 = vpop.f32.mrb[0].mxu0
    %v828 = vadd.f32 %v331, %v827
    %v829 = vpop.f32.mrb[0].mxu0
    %v830 = vadd.f32 %v336, %v829
    %v831 = vpop.f32.mrb[0].mxu0
    %v832 = vadd.f32 %v336, %v831
    %833 = vmatprep.mubr.bf16.mxu0 0
    %834 = vmatmul.mubr.bf16.gmra.mrb[0].mxu0 %v583
    %v835 = vpop.f32.mrb[0].mxu0
    %v836 = vadd.f32 %v341, %v835
    %v837 = vpop.f32.mrb[0].mxu0
    %v838 = vadd.f32 %v341, %v837
    %v839 = vpop.f32.mrb[0].mxu0
    %v840 = vadd.f32 %v346, %v839
    %v841 = vpop.f32.mrb[0].mxu0
    %v842 = vadd.f32 %v346, %v841
    %843 = vmatprep.mubr.bf16.mxu0 0
    %844 = vmatmul.mubr.bf16.gmra.mrb[0].mxu0 %v586
    %v845 = vpop.f32.mrb[0].mxu0
    %v846 = vadd.f32 %v351, %v845
    %v847 = vpop.f32.mrb[0].mxu0
    %v848 = vadd.f32 %v351, %v847
    %v849 = vpop.f32.mrb[0].mxu0
    %v850 = vadd.f32 %v356, %v849
    %v851 = vpop.f32.mrb[0].mxu0
    %v852 = vadd.f32 %v356, %v851
    %853 = vmatprep.mubr.bf16.mxu0 0
    %854 = vmatmul.mubr.bf16.gmra.mrb[0].mxu0 %v589
    %v855 = vpop.f32.mrb[0].mxu0
    %v856 = vadd.f32 %v361, %v855
    %v857 = vpop.f32.mrb[0].mxu0
    %v858 = vadd.f32 %v361, %v857
    %v859 = vpop.f32.mrb[0].mxu0
    %v860 = vadd.f32 %v366, %v859
    %v861 = vpop.f32.mrb[0].mxu0
    %v862 = vadd.f32 %v366, %v861
    %863 = vdwg.mxu0
    %v864 = vmax.f32 %v626, 0.0
    %v865 = vmax.f32 %v628, 0.0
    %v866 = vmax.f32 %v630, 0.0
    %v867 = vmax.f32 %v632, 0.0
    %v868 = vmax.f32 %v636, 0.0
    %v869 = vmax.f32 %v638, 0.0
    %v870 = vmax.f32 %v640, 0.0
    %v871 = vmax.f32 %v642, 0.0
    %v872 = vmax.f32 %v646, 0.0
    %v873 = vmax.f32 %v648, 0.0
    %v874 = vmax.f32 %v650, 0.0
    %v875 = vmax.f32 %v652, 0.0
    %v876 = vmax.f32 %v656, 0.0
    %v877 = vmax.f32 %v658, 0.0
    %v878 = vmax.f32 %v660, 0.0
    %v879 = vmax.f32 %v662, 0.0
    %v880 = vmax.f32 %v666, 0.0
    %v881 = vmax.f32 %v668, 0.0
    %v882 = vmax.f32 %v670, 0.0
    %v883 = vmax.f32 %v672, 0.0
    %v884 = vmax.f32 %v676, 0.0
    %v885 = vmax.f32 %v678, 0.0
    %v886 = vmax.f32 %v680, 0.0
    %v887 = vmax.f32 %v682, 0.0
    %v888 = vmax.f32 %v686, 0.0
    %v889 = vmax.f32 %v688, 0.0
    %v890 = vmax.f32 %v690, 0.0
    %v891 = vmax.f32 %v692, 0.0
    %v892 = vmax.f32 %v696, 0.0
    %v893 = vmax.f32 %v698, 0.0
    %v894 = vmax.f32 %v700, 0.0
    %v895 = vmax.f32 %v702, 0.0
    %v896 = vmax.f32 %v706, 0.0
    %v897 = vmax.f32 %v708, 0.0
    %v898 = vmax.f32 %v710, 0.0
    %v899 = vmax.f32 %v712, 0.0
    %v900 = vmax.f32 %v716, 0.0
    %v901 = vmax.f32 %v718, 0.0
    %v902 = vmax.f32 %v720, 0.0
    %v903 = vmax.f32 %v722, 0.0
    %v904 = vmax.f32 %v726, 0.0
    %v905 = vmax.f32 %v728, 0.0
    %v906 = vmax.f32 %v730, 0.0
    %v907 = vmax.f32 %v732, 0.0
    %v908 = vmax.f32 %v736, 0.0
    %v909 = vmax.f32 %v738, 0.0
    %v910 = vmax.f32 %v740, 0.0
    %v911 = vmax.f32 %v742, 0.0
    %v912 = vmax.f32 %v746, 0.0
    %v913 = vmax.f32 %v748, 0.0
    %v914 = vmax.f32 %v750, 0.0
    %v915 = vmax.f32 %v752, 0.0
    %v916 = vmax.f32 %v756, 0.0
    %v917 = vmax.f32 %v758, 0.0
    %v918 = vmax.f32 %v760, 0.0
    %v919 = vmax.f32 %v762, 0.0
    %v920 = vmax.f32 %v766, 0.0
    %v921 = vmax.f32 %v768, 0.0
    %v922 = vmax.f32 %v770, 0.0
    %v923 = vmax.f32 %v772, 0.0
    %v924 = vmax.f32 %v776, 0.0
    %v925 = vmax.f32 %v778, 0.0
    %v926 = vmax.f32 %v780, 0.0
    %v927 = vmax.f32 %v782, 0.0
    %v928 = vld [vmem:[%s3] sm:$0xff]
    %v929 = vld [vmem:[%s3 + $0x8] sm:$0xff]
    %v930 = vld [vmem:[%s3 + $0x10] sm:$0xff]
    %v931 = vld [vmem:[%s3 + $0x18] sm:$0xff]
    %v932 = vld [vmem:[%s3 + $0x20] sm:$0xff]
    %v933 = vld [vmem:[%s3 + $0x28] sm:$0xff]
    %v934 = vld [vmem:[%s3 + $0x30] sm:$0xff]
    %v935 = vld [vmem:[%s3 + $0x38] sm:$0xff]
    %v936 = vld [vmem:[%s3 + $0x40] sm:$0xff]
    %v937 = vld [vmem:[%s3 + $0x48] sm:$0xff]
    %v938 = vld [vmem:[%s3 + $0x50] sm:$0xff]
    %v939 = vld [vmem:[%s3 + $0x58] sm:$0xff]
    %v940 = vld [vmem:[%s3 + $0x60] sm:$0xff]
    %v941 = vld [vmem:[%s3 + $0x68] sm:$0xff]
    %v942 = vld [vmem:[%s3 + $0x70] sm:$0xff]
    %v943 = vld [vmem:[%s3 + $0x78] sm:$0xff]
    %v944 = vpack.c.bf16 %v866, %v864
    %v945 = vpack.c.bf16 %v867, %v865
    %v946 = vpack.c.bf16 %v870, %v868
    %v947 = vpack.c.bf16 %v871, %v869
    %v948 = vpack.c.bf16 %v874, %v872
    %v949 = vpack.c.bf16 %v875, %v873
    %v950 = vpack.c.bf16 %v878, %v876
    %v951 = vpack.c.bf16 %v879, %v877
    %v952 = vpack.c.bf16 %v882, %v880
    %v953 = vpack.c.bf16 %v883, %v881
    %v954 = vpack.c.bf16 %v886, %v884
    %v955 = vpack.c.bf16 %v887, %v885
    %v956 = vpack.c.bf16 %v890, %v888
    %v957 = vpack.c.bf16 %v891, %v889
    %v958 = vpack.c.bf16 %v894, %v892
    %v959 = vpack.c.bf16 %v895, %v893
    %v960 = vpack.c.bf16 %v898, %v896
    %v961 = vpack.c.bf16 %v899, %v897
    %v962 = vpack.c.bf16 %v902, %v900
    %v963 = vpack.c.bf16 %v903, %v901
    %v964 = vpack.c.bf16 %v906, %v904
    %v965 = vpack.c.bf16 %v907, %v905
    %v966 = vpack.c.bf16 %v910, %v908
    %v967 = vpack.c.bf16 %v911, %v909
    %v968 = vpack.c.bf16 %v914, %v912
    %v969 = vpack.c.bf16 %v915, %v913
    %v970 = vpack.c.bf16 %v918, %v916
    %v971 = vpack.c.bf16 %v919, %v917
    %v972 = vpack.c.bf16 %v922, %v920
    %v973 = vpack.c.bf16 %v923, %v921
    %v974 = vpack.c.bf16 %v926, %v924
    %v975 = vpack.c.bf16 %v927, %v925
    %v992 = vunpack.c.l.b16 %v928
    %v993 = vunpack.c.h.b16 %v928
    %v994 = vunpack.c.l.b16 %v929
    %v995 = vunpack.c.h.b16 %v929
    %v996 = vunpack.c.l.b16 %v930
    %v997 = vunpack.c.h.b16 %v930
    %v998 = vunpack.c.l.b16 %v931
    %v999 = vunpack.c.h.b16 %v931
    %v1000 = vunpack.c.l.b16 %v932
    %v1001 = vunpack.c.h.b16 %v932
    %v1002 = vunpack.c.l.b16 %v933
    %v1003 = vunpack.c.h.b16 %v933
    %v1004 = vunpack.c.l.b16 %v934
    %v1005 = vunpack.c.h.b16 %v934
    %v1006 = vunpack.c.l.b16 %v935
    %v1007 = vunpack.c.h.b16 %v935
    %v1008 = vunpack.c.l.b16 %v936
    %v1009 = vunpack.c.h.b16 %v936
    %v1010 = vunpack.c.l.b16 %v937
    %v1011 = vunpack.c.h.b16 %v937
    %v1012 = vunpack.c.l.b16 %v938
    %v1013 = vunpack.c.h.b16 %v938
    %v1014 = vunpack.c.l.b16 %v939
    %v1015 = vunpack.c.h.b16 %v939
    %v1016 = vunpack.c.l.b16 %v940
    %v1017 = vunpack.c.h.b16 %v940
    %v1018 = vunpack.c.l.b16 %v941
    %v1019 = vunpack.c.h.b16 %v941
    %v1020 = vunpack.c.l.b16 %v942
    %v1021 = vunpack.c.h.b16 %v942
    %v1022 = vunpack.c.l.b16 %v943
    %v1023 = vunpack.c.h.b16 %v943
    %v1024 = vpack.c.b16 %v994, %v992
    %v1025 = vpack.c.b16 %v995, %v993
    %v1026 = vpack.c.b16 %v998, %v996
    %v1027 = vpack.c.b16 %v999, %v997
    %v1028 = vpack.c.b16 %v1002, %v1000
    %v1029 = vpack.c.b16 %v1003, %v1001
    %v1030 = vpack.c.b16 %v1006, %v1004
    %v1031 = vpack.c.b16 %v1007, %v1005
    %v1032 = vpack.c.b16 %v1010, %v1008
    %v1033 = vpack.c.b16 %v1011, %v1009
    %v1034 = vpack.c.b16 %v1014, %v1012
    %v1035 = vpack.c.b16 %v1015, %v1013
    %v1036 = vpack.c.b16 %v1018, %v1016
    %v1037 = vpack.c.b16 %v1019, %v1017
    %v1038 = vpack.c.b16 %v1022, %v1020
    %v1039 = vpack.c.b16 %v1023, %v1021
    %1056 = vmatprep.subr.bf16.mxu0 %v945
    %1057 = vmatpush1.bf16.msra.mxu0 %v944
    %1058 = vmatprep.subr.bf16.mxu0 %v947
    %1059 = vmatpush1.bf16.msra.mxu0 %v946
    %1060 = vmatprep.subr.bf16.mxu0 %v949
    %1061 = vmatpush1.bf16.msra.mxu0 %v948
    %1062 = vmatprep.subr.bf16.mxu0 %v951
    %1063 = vmatpush1.bf16.msra.mxu0 %v950
    %1064 = vmatprep.subr.bf16.mxu0 %v953
    %1065 = vmatpush1.bf16.msra.mxu0 %v952
    %1066 = vmatprep.subr.bf16.mxu0 %v955
    %1067 = vmatpush1.bf16.msra.mxu0 %v954
    %1068 = vmatprep.subr.bf16.mxu0 %v957
    %1069 = vmatpush1.bf16.msra.mxu0 %v956
    %1070 = vmatprep.subr.bf16.mxu0 %v959
    %1071 = vmatpush1.bf16.msra.mxu0 %v958
    %1072 = vmatprep.subr.bf16.mxu0 %v961
    %1073 = vmatpush1.bf16.msra.mxu0 %v960
    %1074 = vmatprep.subr.bf16.mxu0 %v963
    %1075 = vmatpush1.bf16.msra.mxu0 %v962
    %1076 = vmatprep.subr.bf16.mxu0 %v965
    %1077 = vmatpush1.bf16.msra.mxu0 %v964
    %1078 = vmatprep.subr.bf16.mxu0 %v967
    %1079 = vmatpush1.bf16.msra.mxu0 %v966
    %1080 = vmatprep.subr.bf16.mxu0 %v969
    %1081 = vmatpush1.bf16.msra.mxu0 %v968
    %1082 = vmatprep.subr.bf16.mxu0 %v971
    %1083 = vmatpush1.bf16.msra.mxu0 %v970
    %1084 = vmatprep.subr.bf16.mxu0 %v973
    %1085 = vmatpush1.bf16.msra.mxu0 %v972
    %1086 = vmatprep.subr.bf16.mxu0 %v975
    %1087 = vmatpush1.bf16.msra.mxu0 %v974
    %1088 = vmatprep.mubr.bf16.mxu0 %v1025
    %1089 = vmatmul.mubr.bf16.gmra.mrb[0].mxu0 %v1024
    %v1090 = vpop.f32.mrb[0].mxu0
    %v1091 = vadd.f32 %v786, %v1090
    %v1092 = vpop.f32.mrb[0].mxu0
    %v1093 = vadd.f32 %v788, %v1092
    %v1094 = vpop.f32.mrb[0].mxu0
    %v1095 = vadd.f32 %v790, %v1094
    %v1096 = vpop.f32.mrb[0].mxu0
    %v1097 = vadd.f32 %v792, %v1096
    %1098 = vmatprep.mubr.bf16.mxu0 %v1027
    %1099 = vmatmul.mubr.bf16.gmra.mrb[0].mxu0 %v1026
    %v1100 = vpop.f32.mrb[0].mxu0
    %v1101 = vadd.f32 %v796, %v1100
    %v1102 = vpop.f32.mrb[0].mxu0
    %v1103 = vadd.f32 %v798, %v1102
    %v1104 = vpop.f32.mrb[0].mxu0
    %v1105 = vadd.f32 %v800, %v1104
    %v1106 = vpop.f32.mrb[0].mxu0
    %v1107 = vadd.f32 %v802, %v1106
    %1108 = vmatprep.mubr.bf16.mxu0 %v1029
    %1109 = vmatmul.mubr.bf16.gmra.mrb[0].mxu0 %v1028
    %v1110 = vpop.f32.mrb[0].mxu0
    %v1111 = vadd.f32 %v806, %v1110
    %v1112 = vpop.f32.mrb[0].mxu0
    %v1113 = vadd.f32 %v808, %v1112
    %v1114 = vpop.f32.mrb[0].mxu0
    %v1115 = vadd.f32 %v810, %v1114
    %v1116 = vpop.f32.mrb[0].mxu0
    %v1117 = vadd.f32 %v812, %v1116
    %1118 = vmatprep.mubr.bf16.mxu0 %v1031
    %1119 = vmatmul.mubr.bf16.gmra.mrb[0].mxu0 %v1030
    %v1120 = vpop.f32.mrb[0].mxu0
    %v1121 = vadd.f32 %v816, %v1120
    %v1122 = vpop.f32.mrb[0].mxu0
    %v1123 = vadd.f32 %v818, %v1122
    %v1124 = vpop.f32.mrb[0].mxu0
    %v1125 = vadd.f32 %v820, %v1124
    %v1126 = vpop.f32.mrb[0].mxu0
    %v1127 = vadd.f32 %v822, %v1126
    %1128 = vmatprep.mubr.bf16.mxu0 %v1033
    %1129 = vmatmul.mubr.bf16.gmra.mrb[0].mxu0 %v1032
    %v1130 = vpop.f32.mrb[0].mxu0
    %v1131 = vadd.f32 %v826, %v1130
    %v1132 = vpop.f32.mrb[0].mxu0
    %v1133 = vadd.f32 %v828, %v1132
    %v1134 = vpop.f32.mrb[0].mxu0
    %v1135 = vadd.f32 %v830, %v1134
    %v1136 = vpop.f32.mrb[0].mxu0
    %v1137 = vadd.f32 %v832, %v1136
    %1138 = vmatprep.mubr.bf16.mxu0 %v1035
    %1139 = vmatmul.mubr.bf16.gmra.mrb[0].mxu0 %v1034
    %v1140 = vpop.f32.mrb[0].mxu0
    %v1141 = vadd.f32 %v836, %v1140
    %v1142 = vpop.f32.mrb[0].mxu0
    %v1143 = vadd.f32 %v838, %v1142
    %v1144 = vpop.f32.mrb[0].mxu0
    %v1145 = vadd.f32 %v840, %v1144
    %v1146 = vpop.f32.mrb[0].mxu0
    %v1147 = vadd.f32 %v842, %v1146
    %1148 = vmatprep.mubr.bf16.mxu0 %v1037
    %1149 = vmatmul.mubr.bf16.gmra.mrb[0].mxu0 %v1036
    %v1150 = vpop.f32.mrb[0].mxu0
    %v1151 = vadd.f32 %v846, %v1150
    %v1152 = vpop.f32.mrb[0].mxu0
    %v1153 = vadd.f32 %v848, %v1152
    %v1154 = vpop.f32.mrb[0].mxu0
    %v1155 = vadd.f32 %v850, %v1154
    %v1156 = vpop.f32.mrb[0].mxu0
    %v1157 = vadd.f32 %v852, %v1156
    %1158 = vmatprep.mubr.bf16.mxu0 %v1039
    %1159 = vmatmul.mubr.bf16.gmra.mrb[0].mxu0 %v1038
    %v1160 = vpop.f32.mrb[0].mxu0
    %v1161 = vadd.f32 %v856, %v1160
    %v1162 = vpop.f32.mrb[0].mxu0
    %v1163 = vadd.f32 %v858, %v1162
    %v1164 = vpop.f32.mrb[0].mxu0
    %v1165 = vadd.f32 %v860, %v1164
    %v1166 = vpop.f32.mrb[0].mxu0
    %v1167 = vadd.f32 %v862, %v1166
    %1168 = vdwg.mxu0
    %v1169 = vmax.f32 %v1091, 0.0
    %v1170 = vmax.f32 %v1093, 0.0
    %v1171 = vmax.f32 %v1095, 0.0
    %v1172 = vmax.f32 %v1097, 0.0
    %v1173 = vmax.f32 %v1101, 0.0
    %v1174 = vmax.f32 %v1103, 0.0
    %v1175 = vmax.f32 %v1105, 0.0
    %v1176 = vmax.f32 %v1107, 0.0
    %v1177 = vmax.f32 %v1111, 0.0
    %v1178 = vmax.f32 %v1113, 0.0
    %v1179 = vmax.f32 %v1115, 0.0
    %v1180 = vmax.f32 %v1117, 0.0
    %v1181 = vmax.f32 %v1121, 0.0
    %v1182 = vmax.f32 %v1123, 0.0
    %v1183 = vmax.f32 %v1125, 0.0
    %v1184 = vmax.f32 %v1127, 0.0
    %v1185 = vmax.f32 %v1131, 0.0
    %v1186 = vmax.f32 %v1133, 0.0
    %v1187 = vmax.f32 %v1135, 0.0
    %v1188 = vmax.f32 %v1137, 0.0
    %v1189 = vmax.f32 %v1141, 0.0
    %v1190 = vmax.f32 %v1143, 0.0
    %v1191 = vmax.f32 %v1145, 0.0
    %v1192 = vmax.f32 %v1147, 0.0
    %v1193 = vmax.f32 %v1151, 0.0
    %v1194 = vmax.f32 %v1153, 0.0
    %v1195 = vmax.f32 %v1155, 0.0
    %v1196 = vmax.f32 %v1157, 0.0
    %v1197 = vmax.f32 %v1161, 0.0
    %v1198 = vmax.f32 %v1163, 0.0
    %v1199 = vmax.f32 %v1165, 0.0
    %v1200 = vmax.f32 %v1167, 0.0
    %v1201 = vld [vmem:[%s4] sm:$0xff]
    %v1202 = vld [vmem:[%s4 + $0x8] sm:$0xff]
    %v1203 = vld [vmem:[%s4 + $0x10] sm:$0xff]
    %v1204 = vld [vmem:[%s4 + $0x18] sm:$0xff]
    %v1205 = vld [vmem:[%s4 + $0x20] sm:$0xff]
    %v1206 = vld [vmem:[%s4 + $0x28] sm:$0xff]
    %v1207 = vld [vmem:[%s4 + $0x30] sm:$0xff]
    %v1208 = vld [vmem:[%s4 + $0x38] sm:$0xff]
    %v1209 = vld [vmem:[%s4 + $0x40] sm:$0xff]
    %v1210 = vld [vmem:[%s4 + $0x48] sm:$0xff]
    %v1211 = vld [vmem:[%s4 + $0x50] sm:$0xff]
    %v1212 = vld [vmem:[%s4 + $0x58] sm:$0xff]
    %v1213 = vld [vmem:[%s4 + $0x60] sm:$0xff]
    %v1214 = vld [vmem:[%s4 + $0x68] sm:$0xff]
    %v1215 = vld [vmem:[%s4 + $0x70] sm:$0xff]
    %v1216 = vld [vmem:[%s4 + $0x78] sm:$0xff]
    %1218 = vset.pattern.permute.xlu0 0
    %1219 = vperm.xlu0 %1218, %v1201
    %v1220 = vpop.permute.xlu0 %1219
    %1223 = vset.pattern.permute.xlu0 0
    %1224 = vperm.xlu0 %1223, %v1202
    %v1225 = vpop.permute.xlu0 %1224
    %1228 = vset.pattern.permute.xlu0 0
    %1229 = vperm.xlu0 %1228, %v1203
    %v1230 = vpop.permute.xlu0 %1229
    %1233 = vset.pattern.permute.xlu0 0
    %1234 = vperm.xlu0 %1233, %v1204
    %v1235 = vpop.permute.xlu0 %1234
    %1238 = vset.pattern.permute.xlu0 0
    %1239 = vperm.xlu0 %1238, %v1205
    %v1240 = vpop.permute.xlu0 %1239
    %1243 = vset.pattern.permute.xlu0 0
    %1244 = vperm.xlu0 %1243, %v1206
    %v1245 = vpop.permute.xlu0 %1244
    %1248 = vset.pattern.permute.xlu0 0
    %1249 = vperm.xlu0 %1248, %v1207
    %v1250 = vpop.permute.xlu0 %1249
    %1253 = vset.pattern.permute.xlu0 0
    %1254 = vperm.xlu0 %1253, %v1208
    %v1255 = vpop.permute.xlu0 %1254
    %1258 = vset.pattern.permute.xlu0 0
    %1259 = vperm.xlu0 %1258, %v1209
    %v1260 = vpop.permute.xlu0 %1259
    %1263 = vset.pattern.permute.xlu0 0
    %1264 = vperm.xlu0 %1263, %v1210
    %v1265 = vpop.permute.xlu0 %1264
    %1268 = vset.pattern.permute.xlu0 0
    %1269 = vperm.xlu0 %1268, %v1211
    %v1270 = vpop.permute.xlu0 %1269
    %1273 = vset.pattern.permute.xlu0 0
    %1274 = vperm.xlu0 %1273, %v1212
    %v1275 = vpop.permute.xlu0 %1274
    %1278 = vset.pattern.permute.xlu0 0
    %1279 = vperm.xlu0 %1278, %v1213
    %v1280 = vpop.permute.xlu0 %1279
    %1283 = vset.pattern.permute.xlu0 0
    %1284 = vperm.xlu0 %1283, %v1214
    %v1285 = vpop.permute.xlu0 %1284
    %1288 = vset.pattern.permute.xlu0 0
    %1289 = vperm.xlu0 %1288, %v1215
    %v1290 = vpop.permute.xlu0 %1289
    %1293 = vset.pattern.permute.xlu0 0
    %1294 = vperm.xlu0 %1293, %v1216
    %v1295 = vpop.permute.xlu0 %1294
    %v1297 = vmul.f32 %v1169, %v1220
    %v1298 = vmul.f32 %v1170, %v1220
    %v1299 = vmul.f32 %v1171, %v1225
    %v1300 = vmul.f32 %v1172, %v1225
    %v1301 = vmul.f32 %v1173, %v1230
    %v1302 = vmul.f32 %v1174, %v1230
    %v1303 = vmul.f32 %v1175, %v1235
    %v1304 = vmul.f32 %v1176, %v1235
    %v1305 = vmul.f32 %v1177, %v1240
    %v1306 = vmul.f32 %v1178, %v1240
    %v1307 = vmul.f32 %v1179, %v1245
    %v1308 = vmul.f32 %v1180, %v1245
    %v1309 = vmul.f32 %v1181, %v1250
    %v1310 = vmul.f32 %v1182, %v1250
    %v1311 = vmul.f32 %v1183, %v1255
    %v1312 = vmul.f32 %v1184, %v1255
    %v1313 = vmul.f32 %v1185, %v1260
    %v1314 = vmul.f32 %v1186, %v1260
    %v1315 = vmul.f32 %v1187, %v1265
    %v1316 = vmul.f32 %v1188, %v1265
    %v1317 = vmul.f32 %v1189, %v1270
    %v1318 = vmul.f32 %v1190, %v1270
    %v1319 = vmul.f32 %v1191, %v1275
    %v1320 = vmul.f32 %v1192, %v1275
    %v1321 = vmul.f32 %v1193, %v1280
    %v1322 = vmul.f32 %v1194, %v1280
    %v1323 = vmul.f32 %v1195, %v1285
    %v1324 = vmul.f32 %v1196, %v1285
    %v1325 = vmul.f32 %v1197, %v1290
    %v1326 = vmul.f32 %v1198, %v1290
    %v1327 = vmul.f32 %v1199, %v1295
    %v1328 = vmul.f32 %v1200, %v1295
    %v1329 = vadd.f32 %v1297, %v1299
    %v1330 = vadd.f32 %v1329, %v1301
    %v1331 = vadd.f32 %v1330, %v1303
    %v1332 = vadd.f32 %v1331, %v1305
    %v1333 = vadd.f32 %v1332, %v1307
    %v1334 = vadd.f32 %v1333, %v1309
    %v1335 = vadd.f32 %v1334, %v1311
    %v1336 = vadd.f32 %v1335, %v1313
    %v1337 = vadd.f32 %v1336, %v1315
    %v1338 = vadd.f32 %v1337, %v1317
    %v1339 = vadd.f32 %v1338, %v1319
    %v1340 = vadd.f32 %v1339, %v1321
    %v1341 = vadd.f32 %v1340, %v1323
    %v1342 = vadd.f32 %v1341, %v1325
    %v1343 = vadd.f32 %v1342, %v1327
    %v1344 = vrot.slane %v1343, 4
    %v1345 = vadd.f32 %v1343, %v1344
    %v1346 = vrot.slane %v1345, 2
    %v1347 = vadd.f32 %v1345, %v1346
    %v1348 = vrot.slane %v1347, 1
    %v1349 = vadd.f32 %v1347, %v1348
    %v1350 = vadd.f32 %v1298, %v1300
    %v1351 = vadd.f32 %v1350, %v1302
    %v1352 = vadd.f32 %v1351, %v1304
    %v1353 = vadd.f32 %v1352, %v1306
    %v1354 = vadd.f32 %v1353, %v1308
    %v1355 = vadd.f32 %v1354, %v1310
    %v1356 = vadd.f32 %v1355, %v1312
    %v1357 = vadd.f32 %v1356, %v1314
    %v1358 = vadd.f32 %v1357, %v1316
    %v1359 = vadd.f32 %v1358, %v1318
    %v1360 = vadd.f32 %v1359, %v1320
    %v1361 = vadd.f32 %v1360, %v1322
    %v1362 = vadd.f32 %v1361, %v1324
    %v1363 = vadd.f32 %v1362, %v1326
    %v1364 = vadd.f32 %v1363, %v1328
    %v1365 = vrot.slane %v1364, 4
    %v1366 = vadd.f32 %v1364, %v1365
    %v1367 = vrot.slane %v1366, 2
    %v1368 = vadd.f32 %v1366, %v1367
    %v1369 = vrot.slane %v1368, 1
    %v1370 = vadd.f32 %v1368, %v1369
    %s1371 = sld [smem:[#allocation2]]
    %v1372 = vstv %s1371
    %v1373 = vadd.f32 %v1349, %v1372
    %v1374 = vadd.f32 %v1370, %v1372
    %v1377 = vcombine.low %v1373, %v1374
    %v1379 = vunpack.c.l.s4 1966171168
    %v1380 = vunpack.c.0.s8 %v1379
    %v1381 = vlaneseq
    %v1382 = vshrl.u32 %v1381, 7
    %v1383 = vsub.s32 %v1380, %v1382
    %v1384 = vrot.slane %v1377, %v1383
    %v1386 = vunpack.c.l.s4 1966171168
    %v1387 = vunpack.c.0.s8 %v1386
    %v1388 = vlaneseq
    %v1389 = vshrl.u32 %v1388, 7
    %v1390 = vsub.s32 %v1387, %v1389
    %v1391 = vrot.slane %v1384, %v1390
    %v1393 = vlaneseq
    %vm1394 = vcmp.ge.s32.totalorder %v1393, 0
    %vm1395 = vcmp.lt.s32.totalorder %v1393, 256
    %vm1396 = vmand %vm1394, %vm1395
    %1397 = vst.msk [vmem:[#allocation3] sm:$0x3] %vm1396, %v1391
    // Predicated region
    $region26: #{tpu_custom_call.1} parent=1 // pred_check
      _
    $region27: #{tpu_custom_call.1} parent=1 // pred_check_branch
      %1399 = sbr.rel (0) target = $region29
    $region28: #{tpu_custom_call.1} parent=1 // pred_region
      %s1401 = ssub.s32 32, 32
      %1402 = vsyncadd [#allocation4], %s1401
      %s1404 = sshll.u32 [#allocation3], 4
      %s1405 = int_to_ptr.vmem [resolvable:$true] %s1404
      %1407 = dma.vmem_to_hbm [thread:$0]  %s1405, 32, %s6, [#allocation4]
    $region29: #{tpu_custom_call.1} parent=1 // pred_fallthru
      _
    // Predicated region
    $region30: #{tpu_custom_call.1} parent=1 // pred_check
      _
    $region31: #{tpu_custom_call.1} parent=1 // pred_check_branch
      %1409 = sbr.rel (0) target = $region33
    $region32: #{tpu_custom_call.1} parent=1 // pred_region
      %1410 = dma.done [#allocation4], 32
    $region33: #{tpu_custom_call.1} parent=1 // pred_fallthru
      _
    %1411 = vsyncpa [#allocation4], 1

</llo_original>
